<compile_context>
chip_gen: v7x
topology: tpu7x:2x2x1
jax: 0.10.0
libtpu: 0.0.40
codegen_flags: <defaults>
</compile_context>

<pallas_src>
import jax
import jax.numpy as jnp
from jax.experimental import pallas as pl
from jax.experimental.pallas import tpu as pltpu


LANE = 128                          # class dim is zero-padded to this lane width
_DEFAULT_SCOPED_VMEM = 32 * 1024 * 1024


def _round_up(x, m):
    return ((x + m - 1) // m) * m


# ----------------------------------------------------------------------------
# Kernels
# ----------------------------------------------------------------------------
def _fused_kernel(x_ref, k_ref, b1_ref, w2t_ref, b2_ref, out_ref):
    """Resident-K path: whole circulant matrix in VMEM, one fused step/tile.

    x_ref   (TB, N)     bf16
    k_ref   (N, N)      bf16   K[i, j] = w1[(i - j) mod N]
    b1_ref  (1, N)      f32
    w2t_ref (N, C_pad)  bf16
    b2_ref  (1, C_pad)  f32
    out_ref (TB, C_pad) f32
    """
    h = jnp.dot(x_ref[...], k_ref[...], preferred_element_type=jnp.float32)
    feat = jnp.maximum(h + b1_ref[...], 0.0)
    out = jnp.dot(feat.astype(w2t_ref.dtype), w2t_ref[...],
                  preferred_element_type=jnp.float32)
    out_ref[...] = out + b2_ref[...]


def _k_tiled_kernel(x_ref, k_ref, b1_ref, w2t_ref, b2_ref, out_ref, acc_ref):
    """Large-N fallback: x @ K contraction tiled over the trailing grid axis.

    Grid = (batch_tiles, k_tiles); reduction axis last ("arbitrary"), f32
    accumulator scratch with pl.when init/finalize.
    """
    kk = pl.program_id(1)

    @pl.when(kk == 0)
    def _():
        acc_ref[...] = jnp.zeros_like(acc_ref)

    acc_ref[...] += jnp.dot(x_ref[...], k_ref[...],
                            preferred_element_type=jnp.float32)

    @pl.when(kk == pl.num_programs(1) - 1)
    def _():
        feat = jnp.maximum(acc_ref[...] + b1_ref[...], 0.0)
        out = jnp.dot(feat.astype(w2t_ref.dtype), w2t_ref[...],
                      preferred_element_type=jnp.float32)
        out_ref[...] = out + b2_ref[...]


# ----------------------------------------------------------------------------
# Parameter prep (hoisted: run once per weight update, not per forward call)
# ----------------------------------------------------------------------------
def build_circulant_matrix(w):
    """K[i, j] = w[(i - j) mod N]  (== Krylov(shift, w) of the torch reference).

    Roll-based construction (contiguous copies) instead of an N^2 gather.
    """
    n = w.shape[0]
    cols = jax.vmap(lambda s: jnp.roll(w, s))(jnp.arange(n))  # cols[j, i] = w[(i-j)%n]
    return cols.T


def prepare_params(w1, b1, w2, b2, *, operand_dtype=jnp.bfloat16):
    """Build K once, cast matmul operands to bf16, lane-pad the head to 128."""
    n = w1.shape[0]
    c = w2.shape[0]
    c_pad = _round_up(max(c, 1), LANE)
    K = build_circulant_matrix(w1.astype(jnp.float32)).astype(operand_dtype)  # (N, N)
    b1_2d = b1.astype(jnp.float32).reshape(1, n)                              # (1, N) f32
    w2t_pad = jnp.zeros((n, c_pad), operand_dtype).at[:, :c].set(
        w2.astype(operand_dtype).T)                                           # (N, C_pad)
    b2_pad = jnp.zeros((1, c_pad), jnp.float32).at[:, :c].set(
        b2.astype(jnp.float32))                                               # (1, C_pad) f32
    return K, b1_2d, w2t_pad, b2_pad, c


# ----------------------------------------------------------------------------
# Sizing helpers (VMEM / tiles)
# ----------------------------------------------------------------------------
def _vmem_capacity_bytes():
    try:
        return int(pltpu.get_tpu_info().vmem_capacity_bytes)
    except Exception:
        return 64 * 1024 * 1024       # conservative fallback: v7x per-TC VMEM


def _vmem_budget_bytes():
    # ~75% of physical VMEM: leaves headroom for compiler-internal scratch
    # (matters on v7x's 64 MiB/TC); automatically scales up on 128 MiB chips.
    return int(0.75 * _vmem_capacity_bytes())


def _vmem_limit(need_bytes):
    if need_bytes <= _DEFAULT_SCOPED_VMEM:
        return None                   # default scoped limit already covers it
    return min(int(need_bytes * 1.2), _vmem_budget_bytes())


def _cost_estimate(b, n, c_pad):
    flops = 2 * b * n * n + 2 * b * n * c_pad
    bytes_accessed = (2 * b * n + 2 * n * n + 2 * n * c_pad
                      + 4 * (n + c_pad) + 4 * b * c_pad)
    return pl.CostEstimate(flops=flops, transcendentals=0,
                           bytes_accessed=bytes_accessed)


def _resident_bytes(n, c_pad):
    # K, W2^T, b1, b2: double-buffered by the BlockSpec pipeline even though
    # their constant index_map means they are only DMA'd once.
    return 2 * (2 * n * n + 2 * n * c_pad + 4 * (n + c_pad))


def _per_row_bytes(n, c_pad):
    # Per batch row: bf16 x tile + f32 out tile (double-buffered) plus the
    # in-flight f32 h / bf16 feat / f32 out temporaries.
    return 2 * (2 * n) + 2 * (4 * c_pad) + 4 * n + 2 * n + 4 * c_pad


def _select_batch_tile(b, n, c_pad):
    """Batch tile: large enough to amortize ~0.35us/step grid overhead, small
    enough for the VMEM budget, and clamped so the grid keeps >= 8 steps
    (>= 4 per TensorCore on v7x) for DMA/compute overlap."""
    avail = _vmem_budget_bytes() - _resident_bytes(n, c_pad)
    tb_max = (avail // _per_row_bytes(n, c_pad)) if avail > 0 else 256
    tb = int(min(2048, max(256, (tb_max // 256) * 256)))
    while tb > 256 and pl.cdiv(b, tb) < 8:
        tb //= 2
    return max(tb, 256)


def _select_k_tile(n, k_tile):
    if k_tile is not None:
        return int(k_tile)
    n128 = _round_up(n, 128)
    for cand in (1024, 512, 256):
        if n128 % cand == 0:
            return cand
    return 128


def _select_k_tiled_batch_tile(b, n, c_pad, tk):
    resident = 2 * (2 * tk * n + 2 * n * c_pad + 4 * (n + c_pad))
    per_row = 2 * (2 * tk) + 4 * n + 2 * n + 2 * (4 * c_pad) + 4 * c_pad
    avail = _vmem_budget_bytes() - resident
    tb_max = (avail // per_row) if avail > 0 else 256
    tb = int(min(1024, max(256, (tb_max // 256) * 256)))
    while tb > 256 and pl.cdiv(b, tb) < 8:
        tb //= 2
    return max(tb, 256)


# ----------------------------------------------------------------------------
# Forward-pass wrappers
# ----------------------------------------------------------------------------
def _k_tiled_forward(x2d, K, b1_2d, w2t_pad, b2_pad, n_classes, cost, *,
                     k_tile=None, batch_tile=None):
    """Large-N path: circulant streamed in row-slabs, contraction on grid axis 1."""
    b, n = x2d.shape
    c_pad = w2t_pad.shape[1]
    tk = _select_k_tile(n, k_tile)
    tb = batch_tile if batch_tile is not None else _select_k_tiled_batch_tile(
        b, n, c_pad, tk)

    n_pad = _round_up(n, tk)
    b_pad = _round_up(b, tb)
    if n_pad != n:
        # Zero-pad the contraction: extra x columns / K rows contribute 0.
        x2d = jnp.pad(x2d, ((0, 0), (0, n_pad - n)))
        K = jnp.pad(K, ((0, n_pad - n), (0, 0)))
    if b_pad != b:
        x2d = jnp.pad(x2d, ((0, b_pad - b), (0, 0)))

    need = (2 * (2 * tb * tk) + 2 * (2 * tk * n) + 2 * (2 * n * c_pad)
            + 2 * 4 * (n + c_pad) + 2 * (4 * tb * c_pad)
            + 4 * tb * n + 2 * tb * n + 4 * tb * c_pad)

    out_pad = pl.pallas_call(
        _k_tiled_kernel,
        out_shape=jax.ShapeDtypeStruct((b_pad, c_pad), jnp.float32),
        grid=(b_pad // tb, n_pad // tk),
        in_specs=[
            pl.BlockSpec((tb, tk), lambda i, k: (i, k)),      # x tile (streams)
            pl.BlockSpec((tk, n), lambda i, k: (k, 0)),       # K row-slab (streams)
            pl.BlockSpec((1, n), lambda i, k: (0, 0)),        # b1 (resident)
            pl.BlockSpec((n, c_pad), lambda i, k: (0, 0)),    # W2^T (resident)
            pl.BlockSpec((1, c_pad), lambda i, k: (0, 0)),    # b2 (resident)
        ],
        out_specs=pl.BlockSpec((tb, c_pad), lambda i, k: (i, 0)),
        scratch_shapes=[pltpu.VMEM((tb, n), jnp.float32)],    # f32 accumulator
        cost_estimate=cost,
        compiler_params=pltpu.CompilerParams(
            dimension_semantics=("parallel", "arbitrary"),
            vmem_limit_bytes=_vmem_limit(need)),
    )(x2d, K, b1_2d, w2t_pad, b2_pad)
    return out_pad[:b, :n_classes]


def two_layer_circulant_apply(x_nchw, K, b1_2d, w2t_pad, b2_pad, n_classes, *,
                              force_k_tiled=False, k_tile=None, batch_tile=None):
    """Forward pass. x_nchw: (B, C, H, W) float -> logits (B, n_classes) f32."""
    b = x_nchw.shape[0]
    x2d = x_nchw.reshape(b, -1).astype(K.dtype)   # torch .view(B, -1); bf16 operand
    n = x2d.shape[1]
    c_pad = w2t_pad.shape[1]
    assert K.shape[1] == n and w2t_pad.shape[0] == n, "param/input shape mismatch"

    cost = _cost_estimate(b, n, c_pad)
    budget = _vmem_budget_bytes()
    resident = _resident_bytes(n, c_pad)
    per_row = _per_row_bytes(n, c_pad)

    # Large-N fallback: resident circulant (double-buffered) + a minimal batch
    # tile no longer fits the VMEM budget -> tile the contraction instead.
    if force_k_tiled or (resident + 256 * per_row > budget):
        return _k_tiled_forward(x2d, K, b1_2d, w2t_pad, b2_pad, n_classes, cost,
                                k_tile=k_tile, batch_tile=batch_tile)

    tb = batch_tile if batch_tile is not None else _select_batch_tile(b, n, c_pad)

    if b <= tb:
        # Small batch: single invocation, all operands resident in VMEM.
        # (No grid — the ~0.35us/step grid overhead would dominate here.)
        need = (2 * b * n + 2 * n * n + 2 * n * c_pad + 4 * (n + c_pad)
                + 4 * b * c_pad + 4 * b * n + 2 * b * n)
        vmem = pl.BlockSpec(memory_space=pltpu.MemorySpace.VMEM)
        out_pad = pl.pallas_call(
            _fused_kernel,
            out_shape=jax.ShapeDtypeStruct((b, c_pad), jnp.float32),
            in_specs=[vmem] * 5,
            out_specs=vmem,
            cost_estimate=cost,
            compiler_params=pltpu.CompilerParams(
                vmem_limit_bytes=_vmem_limit(need)),
        )(x2d, K, b1_2d, w2t_pad, b2_pad)
        return out_pad[:, :n_classes]

    # Large batch: 1-D grid over VMEM/step-overhead-sized batch tiles; K / W2^T
    # / biases stay resident (constant index_map => DMA'd once).  Batch axis is
    # "parallel" so v7x shards it across its two TensorCores.
    b_pad = _round_up(b, tb)
    if b_pad != b:
        x2d = jnp.pad(x2d, ((0, b_pad - b), (0, 0)))
    need = resident + tb * per_row
    out_pad = pl.pallas_call(
        _fused_kernel,
        out_shape=jax.ShapeDtypeStruct((b_pad, c_pad), jnp.float32),
        grid=(b_pad // tb,),
        in_specs=[
            pl.BlockSpec((tb, n), lambda i: (i, 0)),        # x tile (streams)
            pl.BlockSpec((n, n), lambda i: (0, 0)),         # K (resident)
            pl.BlockSpec((1, n), lambda i: (0, 0)),         # b1 (resident)
            pl.BlockSpec((n, c_pad), lambda i: (0, 0)),     # W2^T (resident)
            pl.BlockSpec((1, c_pad), lambda i: (0, 0)),     # b2 (resident)
        ],
        out_specs=pl.BlockSpec((tb, c_pad), lambda i: (i, 0)),
        cost_estimate=cost,
        compiler_params=pltpu.CompilerParams(
            dimension_semantics=("parallel",),
            vmem_limit_bytes=_vmem_limit(need)),
    )(x2d, K, b1_2d, w2t_pad, b2_pad)
    return out_pad[:b, :n_classes]


def two_layer_circulant(x_nchw, w1, b1, w2, b2):
    """Convenience wrapper matching the original parameterization."""
    K, b1_2d, w2t_pad, b2_pad, c = prepare_params(w1, b1, w2, b2)
    return two_layer_circulant_apply(x_nchw, K, b1_2d, w2t_pad, b2_pad, c)


# ----------------------------------------------------------------------------
# Pure-JAX f32 reference
# ----------------------------------------------------------------------------
def reference(x_nchw, w1, b1, w2, b2):
    b = x_nchw.shape[0]
    x2d = x_nchw.reshape(b, -1).astype(jnp.float32)
    K = build_circulant_matrix(w1.astype(jnp.float32))
    feat = jnp.maximum(x2d @ K + b1[None, :].astype(jnp.float32), 0.0)
    return feat @ w2.astype(jnp.float32).T + b2[None, :].astype(jnp.float32)


def _make_params(key, n_features, n_classes):
    kw1, kb1, kw2, kb2 = jax.random.split(key, 4)
    stdv = 1.0 / (n_features ** 0.5)   # Circulant / nn.Linear default init
    w1 = jax.random.uniform(kw1, (n_features,), minval=-stdv, maxval=stdv,
                            dtype=jnp.float32)
    b1 = jax.random.uniform(kb1, (n_features,), minval=-stdv, maxval=stdv,
                            dtype=jnp.float32)
    w2 = jax.random.uniform(kw2, (n_classes, n_features), minval=-stdv,
                            maxval=stdv, dtype=jnp.float32)
    b2 = jax.random.uniform(kb2, (n_classes,), minval=-stdv, maxval=stdv,
                            dtype=jnp.float32)
    return w1, b1, w2, b2


if __name__ == "__main__":
    n_classes = 10
    H = Wd = 16

    key = jax.random.PRNGKey(0)
    kx1, kx2, kx3, kpA, kpB = jax.random.split(key, 5)

    # ---- config A: (B, 1, 16, 16) -> n_features = 256 ------------------------
    nA = H * Wd
    w1, b1, w2, b2 = _make_params(kpA, nA, n_classes)
    paramsA = prepare_params(w1, b1, w2, b2)

    # 1) small batch -> single-shot (no-grid) path
    x = jax.random.normal(kx1, (8, 1, H, Wd), dtype=jnp.float32)
    out = jax.block_until_ready(two_layer_circulant_apply(x, *paramsA))
    ref = reference(x, w1, b1, w2, b2)
    assert out.shape == (8, n_classes)
    assert jnp.allclose(out, ref, atol=3e-2, rtol=3e-2), (
        "small-batch mismatch, max abs err %f"
        % float(jnp.max(jnp.abs(out - ref))))

    # 2) large batch -> batch-tiled grid path (resident circulant, bf16 MXU)
    B2 = 4096
    x_big = jax.random.normal(kx2, (B2, 1, H, Wd), dtype=jnp.float32)
    out_big = jax.block_until_ready(two_layer_circulant_apply(x_big, *paramsA))
    ref_big = reference(x_big, w1, b1, w2, b2)
    assert out_big.shape == (B2, n_classes)
    assert jnp.allclose(out_big, ref_big, atol=3e-2, rtol=3e-2), (
        "large-batch mismatch, max abs err %f"
        % float(jnp.max(jnp.abs(out_big - ref_big))))

    # 3) K-tiled large-N fallback, forced at a small shape so it is exercised:
    #    (B, 2, 16, 16) -> n_features = 512, contraction tiled with k_tile=256.
    nB = 2 * H * Wd
    w1b, b1b, w2b, b2b = _make_params(kpB, nB, n_classes)
    paramsB = prepare_params(w1b, b1b, w2b, b2b)
    B3 = 512
    x_kt = jax.random.normal(kx3, (B3, 2, H, Wd), dtype=jnp.float32)
    out_kt = jax.block_until_ready(two_layer_circulant_apply(
        x_kt, *paramsB, force_k_tiled=True, k_tile=256))
    ref_kt = reference(x_kt, w1b, b1b, w2b, b2b)
    assert out_kt.shape == (B3, n_classes)
    assert jnp.allclose(out_kt, ref_kt, atol=3e-2, rtol=3e-2), (
        "k-tiled mismatch, max abs err %f"
        % float(jnp.max(jnp.abs(out_kt - ref_kt))))

    print("KERNEL_OK")
</pallas_src>

<mosaic_0001>
module attributes {stable_mosaic.version = 11 : i64} {
  func.func @_fused_kernel(%arg0: memref<8x256xbf16, #tpu.memory_space<vmem>>, %arg1: memref<256x256xbf16, #tpu.memory_space<vmem>>, %arg2: memref<1x256xf32, #tpu.memory_space<vmem>>, %arg3: memref<256x128xbf16, #tpu.memory_space<vmem>>, %arg4: memref<1x128xf32, #tpu.memory_space<vmem>>, %arg5: memref<8x128xf32, #tpu.memory_space<vmem>>) attributes {dimension_semantics = [], scalar_prefetch = 0 : i64, scratch_operands = 0 : i64, tpu.core_type = #tpu.core_type<tc>} {
    %c0 = arith.constant 0 : index
    %c0_0 = arith.constant 0 : index
    %0 = vector.load %arg0[%c0, %c0_0] : memref<8x256xbf16, #tpu.memory_space<vmem>>, vector<8x256xbf16>
    %c0_1 = arith.constant 0 : index
    %c0_2 = arith.constant 0 : index
    %1 = vector.load %arg1[%c0_1, %c0_2] : memref<256x256xbf16, #tpu.memory_space<vmem>>, vector<256x256xbf16>
    %cst = arith.constant dense<0.000000e+00> : vector<8x256xf32>
    %2 = tpu.matmul %0, %1, %cst {dimension_numbers = #tpu.dot_dimension_numbers<[1], [0], [0], [1], [0, 0, 1, 1], [], []>} : vector<8x256xbf16>, vector<256x256xbf16>, vector<8x256xf32> -> vector<8x256xf32>
    %c0_3 = arith.constant 0 : index
    %c0_4 = arith.constant 0 : index
    %3 = vector.load %arg2[%c0_3, %c0_4] : memref<1x256xf32, #tpu.memory_space<vmem>>, vector<1x256xf32>
    %4 = vector.broadcast %3 : vector<1x256xf32> to vector<8x256xf32>
    %5 = arith.addf %2, %4 : vector<8x256xf32>
    %cst_5 = arith.constant 0.000000e+00 : f32
    %6 = vector.broadcast %cst_5 : f32 to vector<8x256xf32>
    %7 = arith.maximumf %5, %6 : vector<8x256xf32>
    %8 = arith.truncf %7 : vector<8x256xf32> to vector<8x256xbf16>
    %c0_6 = arith.constant 0 : index
    %c0_7 = arith.constant 0 : index
    %9 = vector.load %arg3[%c0_6, %c0_7] : memref<256x128xbf16, #tpu.memory_space<vmem>>, vector<256x128xbf16>
    %cst_8 = arith.constant dense<0.000000e+00> : vector<8x128xf32>
    %10 = tpu.matmul %8, %9, %cst_8 {dimension_numbers = #tpu.dot_dimension_numbers<[1], [0], [0], [1], [0, 0, 1, 1], [], []>} : vector<8x256xbf16>, vector<256x128xbf16>, vector<8x128xf32> -> vector<8x128xf32>
    %c0_9 = arith.constant 0 : index
    %c0_10 = arith.constant 0 : index
    %11 = vector.load %arg4[%c0_9, %c0_10] : memref<1x128xf32, #tpu.memory_space<vmem>>, vector<1x128xf32>
    %12 = vector.broadcast %11 : vector<1x128xf32> to vector<8x128xf32>
    %13 = arith.addf %10, %12 : vector<8x128xf32>
    %c0_11 = arith.constant 0 : index
    %c0_12 = arith.constant 0 : index
    %14 = vector.load %arg5[%c0_11, %c0_12] : memref<8x128xf32, #tpu.memory_space<vmem>>, vector<8x128xf32>
    tpu.vector_store %arg5[%c0_11, %c0_12], %13 {strides = array<i32>} : memref<8x128xf32, #tpu.memory_space<vmem>>, vector<8x128xf32>,
    return
  }
}

</mosaic_0001>

<llo_original>
// kernel: tpu_custom_call.1
$region0: #{tpu_custom_call.1}
  #allocation0 [shape = 'u32[]', space=smem, size = 0x4, offset = 0x4, fixed_abs, tag = 'smem constant byte address 0x4 - core index']
  #allocation1 [shape = 'u32[144,128]{1,0:T(1,128)}', space=vmem, size = 0x12000, scoped, tag = 'internal scratch']
  %s0 = inlined_call_operand.hbm [shape: bf16[8,256], index: 0, kind: input, shape index: {}]
  %s1 = inlined_call_operand.hbm [shape: bf16[256,256], index: 1, kind: input, shape index: {}]
  %s2 = inlined_call_operand.vmem [shape: f32[1,256], index: 2, kind: input, shape index: {}]
  %s3 = inlined_call_operand.hbm [shape: bf16[256,128], index: 3, kind: input, shape index: {}]
  %s4 = inlined_call_operand.vmem [shape: f32[1,128], index: 4, kind: input, shape index: {}]
  %s5 = inlined_call_operand.hbm [shape: f32[8,128], index: 5, kind: output, shape index: {}]
  %s6 = sld [smem:[#allocation0]]
  $region42: #{tpu_custom_call.1} parent=0
    _
  %s8 = ssub.s32 1, %s6
  %s9 = scalar_select 0, %s8, %s6
  $region1: #{tpu_custom_call.1} parent=0
    #allocation2 [shape = 'u8[4096]{0}', space=vmem, size = 0x1000, scoped, tag = 'input window, operand 0, single buffered']
    #allocation3 [shape = 's32[1]{0}', space=sflag, size = 0x4, scoped, tag = 'scoped memory for tpu_custom_call.1']
    #allocation4 [shape = 's32[1]{0}', space=sflag, size = 0x4, scoped, tag = 'scoped memory for tpu_custom_call.1']
    #allocation5 [shape = 'u8[131072]{0}', space=vmem, size = 0x20000, scoped, tag = 'input window, operand 1, single buffered']
    #allocation6 [shape = 's32[1]{0}', space=sflag, size = 0x4, scoped, tag = 'scoped memory for tpu_custom_call.1']
    #allocation7 [shape = 'u8[65536]{0}', space=vmem, size = 0x10000, scoped, tag = 'input window, operand 3, single buffered']
    #allocation8 [shape = 'u8[4096]{0}', space=vmem, size = 0x1000, scoped, tag = 'output window, operand 0, single buffered']
    %10 = vsyncpa [#allocation3], 0
    %11 = vsyncpa [#allocation6], 0
    %12 = vsyncpa [#allocation4], 0
    // Predicated region
    $region2: #{tpu_custom_call.1} parent=1 // pred_check
      _
    $region3: #{tpu_custom_call.1} parent=1 // pred_check_branch
      %14 = sbr.rel (0) target = $region5
    $region4: #{tpu_custom_call.1} parent=1 // pred_region
      %s16 = ssub.s32 128, 128
      %17 = vsyncadd [#allocation3], %s16
      %s19 = sshll.u32 [#allocation2], 4
      %s20 = int_to_ptr.vmem [resolvable:$true] %s19
      %22 = dma.hbm_to_vmem [thread:$0]  %s0, 128, %s20, [#allocation3]
    $region5: #{tpu_custom_call.1} parent=1 // pred_fallthru
      _
    // Predicated region
    $region6: #{tpu_custom_call.1} parent=1 // pred_check
      _
    $region7: #{tpu_custom_call.1} parent=1 // pred_check_branch
      %24 = sbr.rel (0) target = $region9
    $region8: #{tpu_custom_call.1} parent=1 // pred_region
      %s26 = ssub.s32 4096, 4096
      %27 = vsyncadd [#allocation6], %s26
      %s28 = sshll.u32 [#allocation5], 4
      %s29 = int_to_ptr.vmem [resolvable:$true] %s28
      %34 = dma.hbm_to_vmem [thread:$0]  %s1, 4096, %s29, [#allocation6], 128, 128, 8
    $region9: #{tpu_custom_call.1} parent=1 // pred_fallthru
      _
    // Predicated region
    $region10: #{tpu_custom_call.1} parent=1 // pred_check
      _
    $region11: #{tpu_custom_call.1} parent=1 // pred_check_branch
      %36 = sbr.rel (0) target = $region13
    $region12: #{tpu_custom_call.1} parent=1 // pred_region
      _
    $region13: #{tpu_custom_call.1} parent=1 // pred_fallthru
      _
    // Predicated region
    $region14: #{tpu_custom_call.1} parent=1 // pred_check
      _
    $region15: #{tpu_custom_call.1} parent=1 // pred_check_branch
      %38 = sbr.rel (0) target = $region17
    $region16: #{tpu_custom_call.1} parent=1 // pred_region
      %s40 = ssub.s32 2048, 2048
      %41 = vsyncadd [#allocation6], %s40
      %s42 = sshll.u32 [#allocation7], 4
      %s43 = int_to_ptr.vmem [resolvable:$true] %s42
      %48 = dma.hbm_to_vmem [thread:$0]  %s3, 2048, %s43, [#allocation6], 64, 64, 4
    $region17: #{tpu_custom_call.1} parent=1 // pred_fallthru
      _
    // Predicated region
    $region18: #{tpu_custom_call.1} parent=1 // pred_check
      _
    $region19: #{tpu_custom_call.1} parent=1 // pred_check_branch
      %50 = sbr.rel (0) target = $region21
    $region20: #{tpu_custom_call.1} parent=1 // pred_region
      _
    $region21: #{tpu_custom_call.1} parent=1 // pred_fallthru
      _
    // Predicated region
    $region22: #{tpu_custom_call.1} parent=1 // pred_check
      _
    $region23: #{tpu_custom_call.1} parent=1 // pred_check_branch
      %52 = sbr.rel (0) target = $region25
    $region24: #{tpu_custom_call.1} parent=1 // pred_region
      %53 = dma.done [#allocation3], 128
    $region25: #{tpu_custom_call.1} parent=1 // pred_fallthru
      _
    // Predicated region
    $region26: #{tpu_custom_call.1} parent=1 // pred_check
      _
    $region27: #{tpu_custom_call.1} parent=1 // pred_check_branch
      %55 = sbr.rel (0) target = $region29
    $region28: #{tpu_custom_call.1} parent=1 // pred_region
      %56 = dma.done [#allocation6], 4096
    $region29: #{tpu_custom_call.1} parent=1 // pred_fallthru
      _
    // Predicated region
    $region30: #{tpu_custom_call.1} parent=1 // pred_check
      _
    $region31: #{tpu_custom_call.1} parent=1 // pred_check_branch
      %58 = sbr.rel (0) target = $region33
    $region32: #{tpu_custom_call.1} parent=1 // pred_region
      %59 = dma.done [#allocation6], 2048
    $region33: #{tpu_custom_call.1} parent=1 // pred_fallthru
      _
    %v61 = vld [vmem:[#allocation2] sm:$0xff]
    %v62 = vld [vmem:[#allocation5] sm:$0xff]
    %v63 = vld [vmem:[#allocation5 + $0x8] sm:$0xff]
    %v64 = vld [vmem:[#allocation5 + $0x10] sm:$0xff]
    %v65 = vld [vmem:[#allocation5 + $0x18] sm:$0xff]
    %v66 = vld [vmem:[#allocation5 + $0x20] sm:$0xff]
    %v67 = vld [vmem:[#allocation5 + $0x28] sm:$0xff]
    %v68 = vld [vmem:[#allocation5 + $0x30] sm:$0xff]
    %v69 = vld [vmem:[#allocation5 + $0x38] sm:$0xff]
    %v70 = vld [vmem:[#allocation5 + $0x40] sm:$0xff]
    %v71 = vld [vmem:[#allocation5 + $0x48] sm:$0xff]
    %v72 = vld [vmem:[#allocation5 + $0x50] sm:$0xff]
    %v73 = vld [vmem:[#allocation5 + $0x58] sm:$0xff]
    %v74 = vld [vmem:[#allocation5 + $0x60] sm:$0xff]
    %v75 = vld [vmem:[#allocation5 + $0x68] sm:$0xff]
    %v76 = vld [vmem:[#allocation5 + $0x70] sm:$0xff]
    %v77 = vld [vmem:[#allocation5 + $0x78] sm:$0xff]
    %v78 = vld [vmem:[#allocation5 + $0x80] sm:$0xff]
    %v79 = vld [vmem:[#allocation5 + $0x88] sm:$0xff]
    %v80 = vld [vmem:[#allocation5 + $0x90] sm:$0xff]
    %v81 = vld [vmem:[#allocation5 + $0x98] sm:$0xff]
    %v82 = vld [vmem:[#allocation5 + $0xa0] sm:$0xff]
    %v83 = vld [vmem:[#allocation5 + $0xa8] sm:$0xff]
    %v84 = vld [vmem:[#allocation5 + $0xb0] sm:$0xff]
    %v85 = vld [vmem:[#allocation5 + $0xb8] sm:$0xff]
    %v86 = vld [vmem:[#allocation5 + $0xc0] sm:$0xff]
    %v87 = vld [vmem:[#allocation5 + $0xc8] sm:$0xff]
    %v88 = vld [vmem:[#allocation5 + $0xd0] sm:$0xff]
    %v89 = vld [vmem:[#allocation5 + $0xd8] sm:$0xff]
    %v90 = vld [vmem:[#allocation5 + $0xe0] sm:$0xff]
    %v91 = vld [vmem:[#allocation5 + $0xe8] sm:$0xff]
    %v92 = vld [vmem:[#allocation5 + $0xf0] sm:$0xff]
    %v93 = vld [vmem:[#allocation5 + $0xf8] sm:$0xff]
    %v94 = vld [vmem:[%s2] sm:$0x3]
    %v96 = vlaneseq
    %v97 = vshrl.u32 %v96, 7
    %v98 = vsub.s32 0, %v97
    %v99 = vrot.slane %v94, %v98
    %v100 = vlaneseq
    %v101 = vshrl.u32 %v100, 7
    %v102 = vsub.s32 1, %v101
    %v103 = vrot.slane %v94, %v102
    %v107 = vunpack.c.l.b16 %v61
    %v108 = vunpack.c.h.b16 %v61
    %v109 = vpack.c.b16 %v107, %v107
    %v110 = vpack.c.b16 %v108, %v108
    %v145 = vunpack.c.l.b16 %v62
    %v146 = vunpack.c.h.b16 %v62
    %v147 = vunpack.c.l.b16 %v63
    %v148 = vunpack.c.h.b16 %v63
    %v149 = vunpack.c.l.b16 %v64
    %v150 = vunpack.c.h.b16 %v64
    %v151 = vunpack.c.l.b16 %v65
    %v152 = vunpack.c.h.b16 %v65
    %v153 = vunpack.c.l.b16 %v66
    %v154 = vunpack.c.h.b16 %v66
    %v155 = vunpack.c.l.b16 %v67
    %v156 = vunpack.c.h.b16 %v67
    %v157 = vunpack.c.l.b16 %v68
    %v158 = vunpack.c.h.b16 %v68
    %v159 = vunpack.c.l.b16 %v69
    %v160 = vunpack.c.h.b16 %v69
    %v161 = vunpack.c.l.b16 %v70
    %v162 = vunpack.c.h.b16 %v70
    %v163 = vunpack.c.l.b16 %v71
    %v164 = vunpack.c.h.b16 %v71
    %v165 = vunpack.c.l.b16 %v72
    %v166 = vunpack.c.h.b16 %v72
    %v167 = vunpack.c.l.b16 %v73
    %v168 = vunpack.c.h.b16 %v73
    %v169 = vunpack.c.l.b16 %v74
    %v170 = vunpack.c.h.b16 %v74
    %v171 = vunpack.c.l.b16 %v75
    %v172 = vunpack.c.h.b16 %v75
    %v173 = vunpack.c.l.b16 %v76
    %v174 = vunpack.c.h.b16 %v76
    %v175 = vunpack.c.l.b16 %v77
    %v176 = vunpack.c.h.b16 %v77
    %v177 = vunpack.c.l.b16 %v78
    %v178 = vunpack.c.h.b16 %v78
    %v179 = vunpack.c.l.b16 %v79
    %v180 = vunpack.c.h.b16 %v79
    %v181 = vunpack.c.l.b16 %v80
    %v182 = vunpack.c.h.b16 %v80
    %v183 = vunpack.c.l.b16 %v81
    %v184 = vunpack.c.h.b16 %v81
    %v185 = vunpack.c.l.b16 %v82
    %v186 = vunpack.c.h.b16 %v82
    %v187 = vunpack.c.l.b16 %v83
    %v188 = vunpack.c.h.b16 %v83
    %v189 = vunpack.c.l.b16 %v84
    %v190 = vunpack.c.h.b16 %v84
    %v191 = vunpack.c.l.b16 %v85
    %v192 = vunpack.c.h.b16 %v85
    %v193 = vunpack.c.l.b16 %v86
    %v194 = vunpack.c.h.b16 %v86
    %v195 = vunpack.c.l.b16 %v87
    %v196 = vunpack.c.h.b16 %v87
    %v197 = vunpack.c.l.b16 %v88
    %v198 = vunpack.c.h.b16 %v88
    %v199 = vunpack.c.l.b16 %v89
    %v200 = vunpack.c.h.b16 %v89
    %v201 = vunpack.c.l.b16 %v90
    %v202 = vunpack.c.h.b16 %v90
    %v203 = vunpack.c.l.b16 %v91
    %v204 = vunpack.c.h.b16 %v91
    %v205 = vunpack.c.l.b16 %v92
    %v206 = vunpack.c.h.b16 %v92
    %v207 = vunpack.c.l.b16 %v93
    %v208 = vunpack.c.h.b16 %v93
    %v209 = vpack.c.b16 %v147, %v145
    %v210 = vpack.c.b16 %v148, %v146
    %v211 = vpack.c.b16 %v151, %v149
    %v212 = vpack.c.b16 %v152, %v150
    %v213 = vpack.c.b16 %v155, %v153
    %v214 = vpack.c.b16 %v156, %v154
    %v215 = vpack.c.b16 %v159, %v157
    %v216 = vpack.c.b16 %v160, %v158
    %v217 = vpack.c.b16 %v163, %v161
    %v218 = vpack.c.b16 %v164, %v162
    %v219 = vpack.c.b16 %v167, %v165
    %v220 = vpack.c.b16 %v168, %v166
    %v221 = vpack.c.b16 %v171, %v169
    %v222 = vpack.c.b16 %v172, %v170
    %v223 = vpack.c.b16 %v175, %v173
    %v224 = vpack.c.b16 %v176, %v174
    %v225 = vpack.c.b16 %v179, %v177
    %v226 = vpack.c.b16 %v180, %v178
    %v227 = vpack.c.b16 %v183, %v181
    %v228 = vpack.c.b16 %v184, %v182
    %v229 = vpack.c.b16 %v187, %v185
    %v230 = vpack.c.b16 %v188, %v186
    %v231 = vpack.c.b16 %v191, %v189
    %v232 = vpack.c.b16 %v192, %v190
    %v233 = vpack.c.b16 %v195, %v193
    %v234 = vpack.c.b16 %v196, %v194
    %v235 = vpack.c.b16 %v199, %v197
    %v236 = vpack.c.b16 %v200, %v198
    %v237 = vpack.c.b16 %v203, %v201
    %v238 = vpack.c.b16 %v204, %v202
    %v239 = vpack.c.b16 %v207, %v205
    %v240 = vpack.c.b16 %v208, %v206
    %273 = vmatprep.subr.bf16.mxu0 %v210
    %274 = vmatpush1.bf16.msra.mxu0 %v209
    %275 = vmatprep.subr.bf16.mxu0 %v212
    %276 = vmatpush1.bf16.msra.mxu0 %v211
    %277 = vmatprep.subr.bf16.mxu0 %v214
    %278 = vmatpush1.bf16.msra.mxu0 %v213
    %279 = vmatprep.subr.bf16.mxu0 %v216
    %280 = vmatpush1.bf16.msra.mxu0 %v215
    %281 = vmatprep.subr.bf16.mxu0 %v218
    %282 = vmatpush1.bf16.msra.mxu0 %v217
    %283 = vmatprep.subr.bf16.mxu0 %v220
    %284 = vmatpush1.bf16.msra.mxu0 %v219
    %285 = vmatprep.subr.bf16.mxu0 %v222
    %286 = vmatpush1.bf16.msra.mxu0 %v221
    %287 = vmatprep.subr.bf16.mxu0 %v224
    %288 = vmatpush1.bf16.msra.mxu0 %v223
    %289 = vmatprep.subr.bf16.mxu0 %v226
    %290 = vmatpush1.bf16.msra.mxu0 %v225
    %291 = vmatprep.subr.bf16.mxu0 %v228
    %292 = vmatpush1.bf16.msra.mxu0 %v227
    %293 = vmatprep.subr.bf16.mxu0 %v230
    %294 = vmatpush1.bf16.msra.mxu0 %v229
    %295 = vmatprep.subr.bf16.mxu0 %v232
    %296 = vmatpush1.bf16.msra.mxu0 %v231
    %297 = vmatprep.subr.bf16.mxu0 %v234
    %298 = vmatpush1.bf16.msra.mxu0 %v233
    %299 = vmatprep.subr.bf16.mxu0 %v236
    %300 = vmatpush1.bf16.msra.mxu0 %v235
    %301 = vmatprep.subr.bf16.mxu0 %v238
    %302 = vmatpush1.bf16.msra.mxu0 %v237
    %303 = vmatprep.subr.bf16.mxu0 %v240
    %304 = vmatpush1.bf16.msra.mxu0 %v239
    %305 = vmatprep.mubr.bf16.mxu0 %v110
    %306 = vmatmul.mubr.bf16.gmra.mrb[0].mxu0 %v109
    %v307 = vpop.f32.mrb[0].mxu0
    %v308 = vadd.f32 %v99, %v307
    %v309 = vpop.f32.mrb[0].mxu0
    %v310 = vadd.f32 %v103, %v309
    %v311 = vpop.f32.mrb[0].mxu0
    %v312 = vpop.f32.mrb[0].mxu0
    %313 = vdwg.mxu0
    %v314 = vmax.f32 %v308, 0.0
    %v315 = vmax.f32 %v310, 0.0
    %v316 = vpack.c.bf16 %v314, %v314
    %v317 = vpack.c.bf16 %v315, %v315
    %v318 = vld [vmem:[#allocation7] sm:$0xf]
    %v319 = vld [vmem:[#allocation7 + $0x4] sm:$0xf]
    %v320 = vld [vmem:[#allocation7 + $0x8] sm:$0xf]
    %v321 = vld [vmem:[#allocation7 + $0xc] sm:$0xf]
    %v322 = vld [vmem:[#allocation7 + $0x10] sm:$0xf]
    %v323 = vld [vmem:[#allocation7 + $0x14] sm:$0xf]
    %v324 = vld [vmem:[#allocation7 + $0x18] sm:$0xf]
    %v325 = vld [vmem:[#allocation7 + $0x1c] sm:$0xf]
    %v326 = vld [vmem:[#allocation7 + $0x20] sm:$0xf]
    %v327 = vld [vmem:[#allocation7 + $0x24] sm:$0xf]
    %v328 = vld [vmem:[#allocation7 + $0x28] sm:$0xf]
    %v329 = vld [vmem:[#allocation7 + $0x2c] sm:$0xf]
    %v330 = vld [vmem:[#allocation7 + $0x30] sm:$0xf]
    %v331 = vld [vmem:[#allocation7 + $0x34] sm:$0xf]
    %v332 = vld [vmem:[#allocation7 + $0x38] sm:$0xf]
    %v333 = vld [vmem:[#allocation7 + $0x3c] sm:$0xf]
    %v334 = vld [vmem:[#allocation7 + $0x40] sm:$0xf]
    %v335 = vld [vmem:[#allocation7 + $0x44] sm:$0xf]
    %v336 = vld [vmem:[#allocation7 + $0x48] sm:$0xf]
    %v337 = vld [vmem:[#allocation7 + $0x4c] sm:$0xf]
    %v338 = vld [vmem:[#allocation7 + $0x50] sm:$0xf]
    %v339 = vld [vmem:[#allocation7 + $0x54] sm:$0xf]
    %v340 = vld [vmem:[#allocation7 + $0x58] sm:$0xf]
    %v341 = vld [vmem:[#allocation7 + $0x5c] sm:$0xf]
    %v342 = vld [vmem:[#allocation7 + $0x60] sm:$0xf]
    %v343 = vld [vmem:[#allocation7 + $0x64] sm:$0xf]
    %v344 = vld [vmem:[#allocation7 + $0x68] sm:$0xf]
    %v345 = vld [vmem:[#allocation7 + $0x6c] sm:$0xf]
    %v346 = vld [vmem:[#allocation7 + $0x70] sm:$0xf]
    %v347 = vld [vmem:[#allocation7 + $0x74] sm:$0xf]
    %v348 = vld [vmem:[#allocation7 + $0x78] sm:$0xf]
    %v349 = vld [vmem:[#allocation7 + $0x7c] sm:$0xf]
    %v350 = vld [vmem:[%s4] sm:$0x1]
    %v352 = vlaneseq
    %v353 = vshrl.u32 %v352, 7
    %v354 = vsub.s32 0, %v353
    %v355 = vrot.slane %v350, %v354
    %v389 = vunpack.c.l.b16 %v318
    %v390 = vunpack.c.l.b16 %v319
    %v391 = vunpack.c.l.b16 %v320
    %v392 = vunpack.c.l.b16 %v321
    %v393 = vunpack.c.l.b16 %v322
    %v394 = vunpack.c.l.b16 %v323
    %v395 = vunpack.c.l.b16 %v324
    %v396 = vunpack.c.l.b16 %v325
    %v397 = vunpack.c.l.b16 %v326
    %v398 = vunpack.c.l.b16 %v327
    %v399 = vunpack.c.l.b16 %v328
    %v400 = vunpack.c.l.b16 %v329
    %v401 = vunpack.c.l.b16 %v330
    %v402 = vunpack.c.l.b16 %v331
    %v403 = vunpack.c.l.b16 %v332
    %v404 = vunpack.c.l.b16 %v333
    %v405 = vunpack.c.l.b16 %v334
    %v406 = vunpack.c.l.b16 %v335
    %v407 = vunpack.c.l.b16 %v336
    %v408 = vunpack.c.l.b16 %v337
    %v409 = vunpack.c.l.b16 %v338
    %v410 = vunpack.c.l.b16 %v339
    %v411 = vunpack.c.l.b16 %v340
    %v412 = vunpack.c.l.b16 %v341
    %v413 = vunpack.c.l.b16 %v342
    %v414 = vunpack.c.l.b16 %v343
    %v415 = vunpack.c.l.b16 %v344
    %v416 = vunpack.c.l.b16 %v345
    %v417 = vunpack.c.l.b16 %v346
    %v418 = vunpack.c.l.b16 %v347
    %v419 = vunpack.c.l.b16 %v348
    %v420 = vunpack.c.l.b16 %v349
    %v421 = vpack.c.b16 %v390, %v389
    %v422 = vpack.c.b16 %v392, %v391
    %v423 = vpack.c.b16 %v394, %v393
    %v424 = vpack.c.b16 %v396, %v395
    %v425 = vpack.c.b16 %v398, %v397
    %v426 = vpack.c.b16 %v400, %v399
    %v427 = vpack.c.b16 %v402, %v401
    %v428 = vpack.c.b16 %v404, %v403
    %v429 = vpack.c.b16 %v406, %v405
    %v430 = vpack.c.b16 %v408, %v407
    %v431 = vpack.c.b16 %v410, %v409
    %v432 = vpack.c.b16 %v412, %v411
    %v433 = vpack.c.b16 %v414, %v413
    %v434 = vpack.c.b16 %v416, %v415
    %v435 = vpack.c.b16 %v418, %v417
    %v436 = vpack.c.b16 %v420, %v419
    %453 = vmatprep.subr.bf16.mxu0 0
    %454 = vmatpush1.bf16.msra.mxu0 %v421
    %455 = vmatprep.subr.bf16.mxu0 0
    %456 = vmatpush1.bf16.msra.mxu0 %v422
    %457 = vmatprep.subr.bf16.mxu0 0
    %458 = vmatpush1.bf16.msra.mxu0 %v423
    %459 = vmatprep.subr.bf16.mxu0 0
    %460 = vmatpush1.bf16.msra.mxu0 %v424
    %461 = vmatprep.subr.bf16.mxu0 0
    %462 = vmatpush1.bf16.msra.mxu0 %v425
    %463 = vmatprep.subr.bf16.mxu0 0
    %464 = vmatpush1.bf16.msra.mxu0 %v426
    %465 = vmatprep.subr.bf16.mxu0 0
    %466 = vmatpush1.bf16.msra.mxu0 %v427
    %467 = vmatprep.subr.bf16.mxu0 0
    %468 = vmatpush1.bf16.msra.mxu0 %v428
    %469 = vmatprep.subr.bf16.mxu0 0
    %470 = vmatpush1.bf16.msra.mxu0 %v429
    %471 = vmatprep.subr.bf16.mxu0 0
    %472 = vmatpush1.bf16.msra.mxu0 %v430
    %473 = vmatprep.subr.bf16.mxu0 0
    %474 = vmatpush1.bf16.msra.mxu0 %v431
    %475 = vmatprep.subr.bf16.mxu0 0
    %476 = vmatpush1.bf16.msra.mxu0 %v432
    %477 = vmatprep.subr.bf16.mxu0 0
    %478 = vmatpush1.bf16.msra.mxu0 %v433
    %479 = vmatprep.subr.bf16.mxu0 0
    %480 = vmatpush1.bf16.msra.mxu0 %v434
    %481 = vmatprep.subr.bf16.mxu0 0
    %482 = vmatpush1.bf16.msra.mxu0 %v435
    %483 = vmatprep.subr.bf16.mxu0 0
    %484 = vmatpush1.bf16.msra.mxu0 %v436
    %485 = vmatprep.mubr.bf16.mxu0 %v317
    %486 = vmatmul.mubr.bf16.gmra.mrb[0].mxu0 %v316
    %v487 = vpop.f32.mrb[0].mxu0
    %v488 = vadd.f32 %v355, %v487
    %v489 = vpop.f32.mrb[0].mxu0
    %v490 = vpop.f32.mrb[0].mxu0
    %v491 = vpop.f32.mrb[0].mxu0
    %492 = vdwg.mxu0
    %493 = vst [vmem:[#allocation8] sm:$0xff] %v488
    // Predicated region
    $region34: #{tpu_custom_call.1} parent=1 // pred_check
      _
    $region35: #{tpu_custom_call.1} parent=1 // pred_check_branch
      %495 = sbr.rel (0) target = $region37
    $region36: #{tpu_custom_call.1} parent=1 // pred_region
      %s497 = ssub.s32 128, 128
      %498 = vsyncadd [#allocation4], %s497
      %s500 = sshll.u32 [#allocation8], 4
      %s501 = int_to_ptr.vmem [resolvable:$true] %s500
      %503 = dma.vmem_to_hbm [thread:$0]  %s501, 128, %s5, [#allocation4]
    $region37: #{tpu_custom_call.1} parent=1 // pred_fallthru
      _
    // Predicated region
    $region38: #{tpu_custom_call.1} parent=1 // pred_check
      _
    $region39: #{tpu_custom_call.1} parent=1 // pred_check_branch
      %505 = sbr.rel (0) target = $region41
    $region40: #{tpu_custom_call.1} parent=1 // pred_region
      %506 = dma.done [#allocation4], 128
    $region41: #{tpu_custom_call.1} parent=1 // pred_fallthru
      _
    %507 = vsyncpa [#allocation3], 1
    %508 = vsyncpa [#allocation6], 1
    %509 = vsyncpa [#allocation4], 1

</llo_original>
